<compile_context>
chip_gen: v6e
topology: v6e:2x2x1
jax: 0.10.0
libtpu: 0.0.40
codegen_flags: <defaults>
</compile_context>

<pallas_src>
import functools

import jax
import jax.numpy as jnp
from jax.experimental import pallas as pl
from jax.experimental.pallas import tpu as pltpu

_LANES = 128
_MAX_BLOCK_ROWS = 2048  # (2048, 128) f32 = 1 MiB per block


def _sublane_multiple(dtype) -> int:
    # Minimum sublane tile per dtype packing: f32 -> 8, bf16/f16 -> 16, int8/fp8 -> 32.
    itemsize = jnp.dtype(dtype).itemsize
    return {4: 8, 2: 16, 1: 32}.get(itemsize, 8)


def _intensity_loss_kernel(gen_ref, gt_ref, out_ref, acc_ref, *,
                           valid_rows: int, block_rows: int,
                           steps_per_split: int):
    p = pl.program_id(0)   # megacore split axis ("parallel")
    s = pl.program_id(1)   # reduction steps within a split ("arbitrary")

    @pl.when(s == 0)
    def _():
        acc_ref[...] = jnp.zeros_like(acc_ref)

    d = gen_ref[...].astype(jnp.float32) - gt_ref[...].astype(jnp.float32)
    sq = d * d  # abs((a-b)^2) == (a-b)^2 for real inputs

    # Mask rows past the valid extent: covers (a) the ragged last block and
    # (b) duplicated clamped blocks introduced by the parallel-split padding.
    global_step = p * steps_per_split + s
    row_start = global_step * block_rows
    row_ids = row_start + jax.lax.broadcasted_iota(jnp.int32, sq.shape, 0)
    sq = jnp.where(row_ids < valid_rows, sq, 0.0)

    acc_ref[...] += sq  # vector accumulator: stays on the VPU every step

    @pl.when(s == pl.num_programs(1) - 1)
    def _():
        # Single cross-lane/cross-sublane reduce per split, done once.
        out_ref[0, 0] = jnp.sum(acc_ref[...])


def intensity_loss(gen_frames: jax.Array, gt_frames: jax.Array) -> jax.Array:
    assert gen_frames.shape == gt_frames.shape, (gen_frames.shape, gt_frames.shape)
    n_elem = gen_frames.size
    if n_elem == 0:
        return jnp.float32(0.0)

    gen_flat = gen_frames.reshape(-1)
    gt_flat = gt_frames.reshape(-1)

    sub = max(_sublane_multiple(gen_frames.dtype),
              _sublane_multiple(gt_frames.dtype))
    chunk = sub * _LANES
    bulk_elems = (n_elem // chunk) * chunk      # aligned bulk processed in Pallas
    bulk_rows = bulk_elems // _LANES

    total = jnp.zeros((), jnp.float32)

    if bulk_rows > 0:
        gen2d = gen_flat[:bulk_elems].reshape(bulk_rows, _LANES)
        gt2d = gt_flat[:bulk_elems].reshape(bulk_rows, _LANES)

        block_rows = min(_MAX_BLOCK_ROWS, bulk_rows)          # multiple of `sub`
        total_steps = (bulk_rows + block_rows - 1) // block_rows
        num_split = 2 if total_steps >= 2 else 1              # v7x: 2 TCs; harmless on 1-TC chips
        steps_per_split = (total_steps + num_split - 1) // num_split
        last_block = total_steps - 1

        def in_map(p, s):
            # Clamp so padded (p, s) iterations re-read the last valid block;
            # the in-kernel row mask zeroes their contribution.
            return (jnp.minimum(p * steps_per_split + s, last_block), 0)

        kernel = functools.partial(
            _intensity_loss_kernel,
            valid_rows=bulk_rows,
            block_rows=block_rows,
            steps_per_split=steps_per_split,
        )

        bytes_in = bulk_elems * (jnp.dtype(gen_frames.dtype).itemsize
                                 + jnp.dtype(gt_frames.dtype).itemsize)

        partials = pl.pallas_call(
            kernel,
            out_shape=jax.ShapeDtypeStruct((num_split, 1), jnp.float32),
            grid_spec=pltpu.PrefetchScalarGridSpec(
                num_scalar_prefetch=0,
                grid=(num_split, steps_per_split),
                in_specs=[
                    pl.BlockSpec((block_rows, _LANES), in_map),
                    pl.BlockSpec((block_rows, _LANES), in_map),
                ],
                out_specs=pl.BlockSpec(
                    (1, 1), lambda p, s: (p, 0), memory_space=pltpu.SMEM
                ),
                scratch_shapes=[pltpu.VMEM((block_rows, _LANES), jnp.float32)],
            ),
            compiler_params=pltpu.CompilerParams(
                dimension_semantics=("parallel", "arbitrary"),
            ),
            cost_estimate=pl.CostEstimate(
                flops=3 * bulk_elems,
                transcendentals=0,
                bytes_accessed=bytes_in + 4 * num_split,
            ),
        )(gen2d, gt2d)
        total = total + jnp.sum(partials)

    if bulk_elems < n_elem:
        # Tiny unaligned tail (< sub*128 elements): plain jnp, negligible cost.
        dt = (gen_flat[bulk_elems:].astype(jnp.float32)
              - gt_flat[bulk_elems:].astype(jnp.float32))
        total = total + jnp.sum(dt * dt)

    return (total / jnp.float32(n_elem)).astype(jnp.float32)


def _reference(gen, gt):
    return jnp.mean(jnp.abs((gen.astype(jnp.float32) - gt.astype(jnp.float32)) ** 2))


if __name__ == "__main__":
    key = jax.random.PRNGKey(0)

    # Primary test: NCHW frames like the PyTorch module (batch=2, C=4, 16x16).
    k1, k2, key = jax.random.split(key, 3)
    gen = jax.random.normal(k1, (2, 4, 16, 16), dtype=jnp.float32)
    gt = jax.random.normal(k2, (2, 4, 16, 16), dtype=jnp.float32)
    loss = intensity_loss(gen, gt)
    jax.block_until_ready(loss)
    ref = _reference(gen, gt)
    assert jnp.allclose(loss, ref, rtol=1e-5, atol=1e-6), (loss, ref)

    # Larger check: exercises multi-block grid, megacore split and the
    # masked partial last block (3072 rows with 2048-row blocks).
    k1, k2, key = jax.random.split(key, 3)
    gen_l = jax.random.normal(k1, (4, 8, 96, 128), dtype=jnp.float32)
    gt_l = jax.random.normal(k2, (4, 8, 96, 128), dtype=jnp.float32)
    loss_l = intensity_loss(gen_l, gt_l)
    jax.block_until_ready(loss_l)
    ref_l = _reference(gen_l, gt_l)
    assert jnp.allclose(loss_l, ref_l, rtol=1e-5, atol=1e-6), (loss_l, ref_l)

    # Ragged check: small unaligned size goes through the jnp tail path.
    k1, k2, key = jax.random.split(key, 3)
    gen_r = jax.random.normal(k1, (2, 3, 17, 9), dtype=jnp.float32)
    gt_r = jax.random.normal(k2, (2, 3, 17, 9), dtype=jnp.float32)
    loss_r = intensity_loss(gen_r, gt_r)
    jax.block_until_ready(loss_r)
    ref_r = _reference(gen_r, gt_r)
    assert jnp.allclose(loss_r, ref_r, rtol=1e-5, atol=1e-6), (loss_r, ref_r)

    print("KERNEL_OK")
</pallas_src>

<mosaic_0001>
module attributes {stable_mosaic.version = 11 : i64} {
  func.func @_intensity_loss_kernel(%arg0: i32, %arg1: i32, %arg2: memref<16x128xf32, #tpu.memory_space<vmem>>, %arg3: memref<16x128xf32, #tpu.memory_space<vmem>>, %arg4: memref<1x1xf32, #tpu.memory_space<smem>>, %arg5: memref<16x128xf32, #tpu.memory_space<vmem>>) attributes {dimension_semantics = [#tpu.dimension_semantics<parallel>, #tpu.dimension_semantics<arbitrary>], iteration_bounds = array<i64: 1, 1>, scalar_prefetch = 0 : i64, scratch_operands = 1 : i64, tpu.core_type = #tpu.core_type<tc>, window_params = [{transform_indices = @transform_0, window_bounds = array<i64: 16, 128>}, {transform_indices = @transform_1, window_bounds = array<i64: 16, 128>}, {transform_indices = @transform_2, window_bounds = array<i64: 1, 1>}]} {
    %c0_i32 = arith.constant 0 : i32
    %0 = arith.cmpi eq, %arg1, %c0_i32 : i32
    %1 = arith.extui %0 : i1 to i32
    %c0_i32_0 = arith.constant 0 : i32
    %2 = arith.cmpi ne, %1, %c0_i32_0 : i32
    scf.if %2 {
      %cst_11 = arith.constant 0.000000e+00 : f32
      %23 = vector.broadcast %cst_11 : f32 to vector<16x128xf32>
      %c0_12 = arith.constant 0 : index
      %c0_13 = arith.constant 0 : index
      %24 = vector.load %arg5[%c0_12, %c0_13] : memref<16x128xf32, #tpu.memory_space<vmem>>, vector<16x128xf32>
      tpu.vector_store %arg5[%c0_12, %c0_13], %23 {strides = array<i32>} : memref<16x128xf32, #tpu.memory_space<vmem>>, vector<16x128xf32>,
    } else {
    }
    %c0 = arith.constant 0 : index
    %c0_1 = arith.constant 0 : index
    %3 = vector.load %arg2[%c0, %c0_1] : memref<16x128xf32, #tpu.memory_space<vmem>>, vector<16x128xf32>
    %c0_2 = arith.constant 0 : index
    %c0_3 = arith.constant 0 : index
    %4 = vector.load %arg3[%c0_2, %c0_3] : memref<16x128xf32, #tpu.memory_space<vmem>>, vector<16x128xf32>
    %5 = arith.subf %3, %4 : vector<16x128xf32>
    %6 = arith.mulf %5, %5 : vector<16x128xf32>
    %c1_i32 = arith.constant 1 : i32
    %7 = arith.muli %arg0, %c1_i32 : i32
    %8 = arith.addi %7, %arg1 : i32
    %c16_i32 = arith.constant 16 : i32
    %9 = arith.muli %8, %c16_i32 : i32
    %10 = tpu.iota {dimensions = array<i32: 0>} : vector<16x128xi32>
    %11 = vector.broadcast %9 : i32 to vector<16x128xi32>
    %12 = arith.addi %11, %10 : vector<16x128xi32>
    %c16_i32_4 = arith.constant 16 : i32
    %13 = vector.broadcast %c16_i32_4 : i32 to vector<16x128xi32>
    %14 = arith.cmpi slt, %12, %13 : vector<16x128xi32>
    %cst = arith.constant 0.000000e+00 : f32
    %15 = vector.broadcast %cst : f32 to vector<16x128xf32>
    %16 = arith.select %14, %6, %15 : vector<16x128xi1>, vector<16x128xf32>
    %c0_5 = arith.constant 0 : index
    %c0_6 = arith.constant 0 : index
    %17 = vector.load %arg5[%c0_5, %c0_6] : memref<16x128xf32, #tpu.memory_space<vmem>>, vector<16x128xf32>
    %18 = arith.addf %17, %16 : vector<16x128xf32>
    %c0_7 = arith.constant 0 : index
    %c0_8 = arith.constant 0 : index
    %19 = vector.load %arg5[%c0_7, %c0_8] : memref<16x128xf32, #tpu.memory_space<vmem>>, vector<16x128xf32>
    tpu.vector_store %arg5[%c0_7, %c0_8], %18 {strides = array<i32>} : memref<16x128xf32, #tpu.memory_space<vmem>>, vector<16x128xf32>,
    %c0_i32_9 = arith.constant 0 : i32
    %20 = arith.cmpi eq, %arg1, %c0_i32_9 : i32
    %21 = arith.extui %20 : i1 to i32
    %c0_i32_10 = arith.constant 0 : i32
    %22 = arith.cmpi ne, %21, %c0_i32_10 : i32
    scf.if %22 {
      %c0_11 = arith.constant 0 : index
      %c0_12 = arith.constant 0 : index
      %23 = vector.load %arg5[%c0_11, %c0_12] : memref<16x128xf32, #tpu.memory_space<vmem>>, vector<16x128xf32>
      %24 = vector.shape_cast %23 : vector<16x128xf32> to vector<1x16x128xf32>
      %cst_13 = arith.constant dense<0.000000e+00> : vector<1xf32>
      %25 = vector.multi_reduction <add>, %24, %cst_13 [1, 2] : vector<1x16x128xf32> to vector<1xf32>
      %26 = vector.shape_cast %25 : vector<1xf32> to vector<1x1x1xf32>
      %27 = vector.extract %26[0, 0, 0] : f32 from vector<1x1x1xf32>
      %c0_14 = arith.constant 0 : index
      %c0_15 = arith.constant 0 : index
      %28 = memref.load %arg4[%c0_14, %c0_15] : memref<1x1xf32, #tpu.memory_space<smem>>
      memref.store %27, %arg4[%c0_14, %c0_15] : memref<1x1xf32, #tpu.memory_space<smem>>
    } else {
    }
    return
  }
  func.func @transform_0(%arg0: i32, %arg1: i32) -> (i32, i32) {
    %c1_i32 = arith.constant 1 : i32
    %0 = arith.muli %arg0, %c1_i32 : i32
    %1 = arith.addi %0, %arg1 : i32
    %c0_i32 = arith.constant 0 : i32
    %2 = arith.minsi %1, %c0_i32 : i32
    %c0_i32_0 = arith.constant 0 : i32
    %c0_i32_1 = arith.constant 0 : i32
    return %2, %c0_i32_0 : i32, i32
  }
  func.func @transform_1(%arg0: i32, %arg1: i32) -> (i32, i32) {
    %c1_i32 = arith.constant 1 : i32
    %0 = arith.muli %arg0, %c1_i32 : i32
    %1 = arith.addi %0, %arg1 : i32
    %c0_i32 = arith.constant 0 : i32
    %2 = arith.minsi %1, %c0_i32 : i32
    %c0_i32_0 = arith.constant 0 : i32
    %c0_i32_1 = arith.constant 0 : i32
    return %2, %c0_i32_0 : i32, i32
  }
  func.func @transform_2(%arg0: i32, %arg1: i32) -> (i32, i32) {
    %c0_i32 = arith.constant 0 : i32
    %c0_i32_0 = arith.constant 0 : i32
    return %arg0, %c0_i32 : i32, i32
  }
}

</mosaic_0001>

<llo_original>
// kernel: tpu_custom_call.1
$region0: #{tpu_custom_call.1}
  #allocation0 [shape = 'u32[]', space=smem, size = 0x4, offset = 0x4, fixed_abs, tag = 'smem constant byte address 0x4 - core index']
  #allocation1 [shape = 'u32[144,128]{1,0:T(1,128)}', space=vmem, size = 0x12000, scoped, tag = 'internal scratch']
  #allocation2 [shape = 'f32[16,128]{1,0:T(8,128)}', space=vmem, size = 0x2000, scoped, tag = 'scratch operand']
  %s0 = inlined_call_operand.hbm [shape: f32[16,128], index: 0, kind: input, shape index: {}]
  %s1 = inlined_call_operand.hbm [shape: f32[16,128], index: 1, kind: input, shape index: {}]
  %s2 = inlined_call_operand.hbm [shape: f32[1,1], index: 2, kind: output, shape index: {}]
  %s3 = sld [smem:[#allocation0]]
  $region34: #{tpu_custom_call.1} parent=0
    _
  %s5 = ssub.s32 1, %s3
  %s6 = scalar_select 0, %s5, %s3
  $region1: #{tpu_custom_call.1} parent=0
    #allocation3 [shape = 'u8[8192]{0}', space=vmem, size = 0x2000, scoped, tag = 'input window, operand 0, single buffered']
    #allocation4 [shape = 's32[1]{0}', space=sflag, size = 0x4, scoped, tag = 'scoped memory for tpu_custom_call.1']
    #allocation5 [shape = 's32[1]{0}', space=sflag, size = 0x4, scoped, tag = 'scoped memory for tpu_custom_call.1']
    #allocation6 [shape = 'u8[8192]{0}', space=vmem, size = 0x2000, scoped, tag = 'input window, operand 1, single buffered']
    #allocation7 [shape = 's32[1]{0}', space=sflag, size = 0x4, scoped, tag = 'scoped memory for tpu_custom_call.1']
    #allocation8 [shape = 'u8[512]{0}', space=smem, size = 0x200, scoped, tag = 'output window, operand 0, single buffered']
    %7 = vsyncpa [#allocation4], 0
    %8 = vsyncpa [#allocation7], 0
    %9 = vsyncpa [#allocation5], 0
    // Predicated region
    $region2: #{tpu_custom_call.1} parent=1 // pred_check
      _
    $region3: #{tpu_custom_call.1} parent=1 // pred_check_branch
      %11 = sbr.rel (0) target = $region5
    $region4: #{tpu_custom_call.1} parent=1 // pred_region
      %s12 = sadd.s32 0, 0
      %p13 = scmp.lt.s32.totalorder %s12, 0
      %s14 = scalar_select %p13, %s12, 0
      %s15 = smul.u32 2, %s14
      %s17 = ssub.s32 256, 256
      %18 = vsyncadd [#allocation4], %s17
      %s19 = smul.addr %s15, 128
      %s20 = scalar_lea.hbm %s0, %s19
      %s21 = sshll.u32 [#allocation3], 4
      %s22 = int_to_ptr.vmem [resolvable:$true] %s21
      %27 = dma.hbm_to_vmem [thread:$0]  %s20, 256, %s22, [#allocation4], 128, 128, 8
    $region5: #{tpu_custom_call.1} parent=1 // pred_fallthru
      _
    // Predicated region
    $region6: #{tpu_custom_call.1} parent=1 // pred_check
      _
    $region7: #{tpu_custom_call.1} parent=1 // pred_check_branch
      %29 = sbr.rel (0) target = $region9
    $region8: #{tpu_custom_call.1} parent=1 // pred_region
      %s30 = sadd.s32 0, 0
      %p31 = scmp.lt.s32.totalorder %s30, 0
      %s32 = scalar_select %p31, %s30, 0
      %s33 = smul.u32 2, %s32
      %s35 = ssub.s32 256, 256
      %36 = vsyncadd [#allocation7], %s35
      %s37 = smul.addr %s33, 128
      %s38 = scalar_lea.hbm %s1, %s37
      %s39 = sshll.u32 [#allocation6], 4
      %s40 = int_to_ptr.vmem [resolvable:$true] %s39
      %45 = dma.hbm_to_vmem [thread:$0]  %s38, 256, %s40, [#allocation7], 128, 128, 8
    $region9: #{tpu_custom_call.1} parent=1 // pred_fallthru
      _
    // Predicated region
    $region10: #{tpu_custom_call.1} parent=1 // pred_check
      _
    $region11: #{tpu_custom_call.1} parent=1 // pred_check_branch
      %47 = sbr.rel (0) target = $region13
    $region12: #{tpu_custom_call.1} parent=1 // pred_region
      %48 = dma.done [#allocation4], 256
    $region13: #{tpu_custom_call.1} parent=1 // pred_fallthru
      _
    // Predicated region
    $region14: #{tpu_custom_call.1} parent=1 // pred_check
      _
    $region15: #{tpu_custom_call.1} parent=1 // pred_check_branch
      %50 = sbr.rel (0) target = $region17
    $region16: #{tpu_custom_call.1} parent=1 // pred_region
      %51 = dma.done [#allocation7], 256
    $region17: #{tpu_custom_call.1} parent=1 // pred_fallthru
      _
    %s52 = sadd.s32 0, 0
    %p53 = scmp.lt.s32.totalorder %s52, 0
    %s54 = scalar_select %p53, %s52, 0
    %s55 = smul.u32 2, %s54
    %s56 = sadd.s32 0, 0
    %p57 = scmp.lt.s32.totalorder %s56, 0
    %s58 = scalar_select %p57, %s56, 0
    %s59 = smul.u32 2, %s58
    %p60 = scmp.eq.s32.totalorder 0, 0
    // Predicated region
    $region18: #{tpu_custom_call.1} parent=1 // pred_check
      %p61 = pneg %p60
    $region19: #{tpu_custom_call.1} parent=1 // pred_check_branch
      %63 = sbr.rel (%p61) target = $region21
    $region20: #{tpu_custom_call.1} parent=1 // pred_region
      %64 = vst [vmem:[#allocation2] sm:$0xff] 0.0
      %65 = vst [vmem:[#allocation2 + $0x8] sm:$0xff] 0.0
    $region21: #{tpu_custom_call.1} parent=1 // pred_fallthru
      _
    %v66 = vld [vmem:[#allocation3] sm:$0xff]
    %v67 = vld [vmem:[#allocation3 + $0x8] sm:$0xff]
    %v68 = vld [vmem:[#allocation6] sm:$0xff]
    %v69 = vld [vmem:[#allocation6 + $0x8] sm:$0xff]
    %v70 = vsub.f32 %v66, %v68
    %v71 = vsub.f32 %v67, %v69
    %v72 = vmul.f32 %v70, %v70
    %v73 = vmul.f32 %v71, %v71
    %s74 = sadd.s32 0, 0
    %s75 = smul.u32 %s74, 16
    %v76 = vlaneseq
    %v77 = vshrl.u32 %v76, 7
    %v78 = vadd.s32 %v77, 8
    %v79 = vstv %s75
    %v80 = vadd.s32 %v79, %v77
    %v81 = vadd.s32 %v79, %v78
    %vm82 = vcmp.lt.s32.totalorder %v80, 16
    %vm83 = vcmp.lt.s32.totalorder %v81, 16
    %v84 = vsel %vm82, %v72, 0.0
    %v85 = vsel %vm83, %v73, 0.0
    %v86 = vld [vmem:[#allocation2] sm:$0xff]
    %v87 = vld [vmem:[#allocation2 + $0x8] sm:$0xff]
    %v88 = vadd.f32 %v86, %v84
    %v89 = vadd.f32 %v87, %v85
    %90 = vst [vmem:[#allocation2] sm:$0xff] %v88
    %91 = vst [vmem:[#allocation2 + $0x8] sm:$0xff] %v89
    // Predicated region
    $region22: #{tpu_custom_call.1} parent=1 // pred_check
      %p92 = pneg %p60
    $region23: #{tpu_custom_call.1} parent=1 // pred_check_branch
      %94 = sbr.rel (%p92) target = $region25
    $region24: #{tpu_custom_call.1} parent=1 // pred_region
      %v95 = vld [vmem:[#allocation2] sm:$0xff]
      %v96 = vld [vmem:[#allocation2 + $0x8] sm:$0xff]
      %v97 = vadd.f32 %v95, %v96
      %98 = vadd.xlane.f32.xlu0 %v97
      %v99 = vpop.xlane.xlu0 %98
      %v100 = vrot.slane %v99, 4
      %v101 = vadd.f32 %v99, %v100
      %v102 = vrot.slane %v101, 2
      %v103 = vadd.f32 %v101, %v102
      %v104 = vrot.slane %v103, 1
      %v105 = vadd.f32 %v103, %v104
      %s106 = vtos %v105
      %s107 = scalar_lea.smem [#allocation8], 0
      %108 = sst [smem:[%s107]] %s106
    $region25: #{tpu_custom_call.1} parent=1 // pred_fallthru
      _
    // Predicated region
    $region26: #{tpu_custom_call.1} parent=1 // pred_check
      _
    $region27: #{tpu_custom_call.1} parent=1 // pred_check_branch
      %110 = sbr.rel (0) target = $region29
    $region28: #{tpu_custom_call.1} parent=1 // pred_region
      %s112 = ssub.s32 16, 16
      %113 = vsyncadd [#allocation5], %s112
      %116 = dma.smem_to_hbm [#allocation8], 16, %s2, [#allocation5]
    $region29: #{tpu_custom_call.1} parent=1 // pred_fallthru
      _
    // Predicated region
    $region30: #{tpu_custom_call.1} parent=1 // pred_check
      _
    $region31: #{tpu_custom_call.1} parent=1 // pred_check_branch
      %118 = sbr.rel (0) target = $region33
    $region32: #{tpu_custom_call.1} parent=1 // pred_region
      %119 = dma.done [#allocation5], 16
    $region33: #{tpu_custom_call.1} parent=1 // pred_fallthru
      _
    %120 = sfence
    %121 = vsyncpa [#allocation4], 1
    %122 = vsyncpa [#allocation7], 1
    %123 = vsyncpa [#allocation5], 1

</llo_original>
